<compile_context>
chip_gen: v7x
topology: tpu7x:2x2x1
jax: 0.10.0
libtpu: 0.0.40
codegen_flags: <defaults>
</compile_context>

<pallas_src>
import jax
import jax.numpy as jnp
from jax.experimental import pallas as pl
from jax.experimental.pallas import tpu as pltpu


# --------------------------------------------------------------------------
# Kernel
# --------------------------------------------------------------------------
def _emb_layernorm_kernel(eps, h_valid, h_pad):
    """Fused (inputs + pos) -> LayerNorm over lane-dense (tS, H_pad) tiles."""
    inv_h = 1.0 / float(h_valid)
    need_mask = h_valid != h_pad

    def kernel(x_ref, pos_ref, g_ref, b_ref, o_ref):
        # x_ref:   (tS, H_pad)  inputs_embeds tile (batch dim Squeezed away)
        # pos_ref: (tS, H_pad)  position-embedding rows for this tile
        # g_ref:   (1, H_pad)   LayerNorm weight
        # b_ref:   (1, H_pad)   LayerNorm bias
        x = x_ref[...].astype(jnp.float32)
        p = pos_ref[...].astype(jnp.float32)
        e = x + p

        # Two-pass mean / variance (matches torch LayerNorm numerics).
        # Padded lanes (if any) are zero, so the sum-based mean is exact with
        # inv_h = 1/H; the centered values are masked before squaring.
        mean = jnp.sum(e, axis=-1, keepdims=True) * inv_h
        d = e - mean
        if need_mask:
            lane = jax.lax.broadcasted_iota(jnp.int32, e.shape, dimension=1)
            d = jnp.where(lane < h_valid, d, 0.0)
        var = jnp.sum(d * d, axis=-1, keepdims=True) * inv_h

        y = d * jax.lax.rsqrt(var + eps)
        y = y * g_ref[...] + b_ref[...]

        # Dropout is identity in eval/inference mode.
        o_ref[...] = y.astype(o_ref.dtype)

    return kernel


# --------------------------------------------------------------------------
# Tiling / VMEM budgeting
# --------------------------------------------------------------------------
def _vmem_budget_bytes():
    """Generation-aware VMEM budget for this kernel's blocks + temporaries."""
    cap = None
    try:
        info = pltpu.get_tpu_info()
        cap = int(getattr(info, "vmem_capacity_bytes", 0)) or None
    except Exception:
        cap = None
    if cap is None:
        cap = 64 * 1024 * 1024  # conservative: v7x per-TC physical VMEM
    # Use ~40% of physical capacity, capped at 28 MiB so the same config is
    # safe on v7x (64 MiB/TC) as well as v5e/v6e (128 MiB).
    budget = min(int(cap * 0.4), 28 * 1024 * 1024)
    # Scoped-VMEM limit handed to the compiler: budget + headroom, <= cap/2.
    limit = min(budget + (4 * 1024 * 1024), cap // 2)
    limit = max(limit, budget)
    return budget, limit


def _pick_seq_tile(S, H_pad, dtype_bytes, vmem_budget_bytes, max_block_bytes):
    """Largest sequence tile (multiple of 8 dividing S, or S itself) such that
    the double-buffered I/O blocks + single-copy f32 temporaries fit the VMEM
    budget and each in/out block stays within max_block_bytes."""
    # Only the three BlockSpec I/O blocks (in, out, pos) are double-buffered;
    # the f32 temporaries (e, centered, y) exist once.
    per_row_io = 2 * 3 * dtype_bytes * H_pad
    per_row_tmp = 3 * 4 * H_pad
    per_row = per_row_io + per_row_tmp

    max_rows_vmem = max(8, vmem_budget_bytes // per_row)
    # Bytes-based cap on DMA granularity (~1-4 MiB per block is the sweet spot).
    max_rows_block = max(8, max_block_bytes // (dtype_bytes * H_pad))
    max_rows = int(min(max_rows_vmem, max_rows_block))

    if S <= max_rows:
        return S
    t = (max_rows // 8) * 8
    while t >= 8:
        if S % t == 0:
            return t
        t -= 8
    return S  # no suitable divisor: whole sequence (always correct)


# --------------------------------------------------------------------------
# Wrapper
# --------------------------------------------------------------------------
def pretrained_input_embeddings(inputs_embeds,
                                position_table,
                                ln_weight,
                                ln_bias,
                                past_key_values_length=0,
                                eps=1e-12,
                                max_block_bytes=None):
    """JAX/Pallas equivalent of PretrainedInputEmbeddings.forward (eval mode).

    inputs_embeds:   [B, S, H]
    position_table:  [max_position_embeddings, H]
    ln_weight/bias:  [H]
    past_key_values_length: MUST be a static Python int (not a tracer).
    """
    B, S, H = inputs_embeds.shape
    max_pos = position_table.shape[0]
    dtype = inputs_embeds.dtype
    dtype_bytes = jnp.dtype(dtype).itemsize

    # Static pkv required (used in Python-level branch / block-index math).
    pkv = int(past_key_values_length)

    # Lane-density: pad H to a multiple of 128 so stores are unmasked `vst`.
    H_pad = ((H + 127) // 128) * 128
    padded = H_pad != H

    if max_block_bytes is None:
        max_block_bytes = 4 * 1024 * 1024
    vmem_budget, vmem_limit = _vmem_budget_bytes()
    tS = _pick_seq_tile(S, H_pad, dtype_bytes, vmem_budget, max_block_bytes)
    n_s = S // tS

    # Position rows: read straight out of the full table when possible
    # (avoids an extra S*H HBM write+read); otherwise one-time contiguous slice.
    table_path = (not padded) and (pkv % tS == 0) and (tS % 8 == 0 or tS == max_pos)
    if table_path:
        pos_arg = position_table
        pkv_block = pkv // tS
        pos_spec = pl.BlockSpec((tS, H_pad), lambda s, b: (pkv_block + s, 0))
    else:
        pos_arg = jax.lax.dynamic_slice(position_table, (pkv, 0), (S, H))
        if padded:
            pos_arg = jnp.pad(pos_arg, ((0, 0), (0, H_pad - H)))
        pos_spec = pl.BlockSpec((tS, H_pad), lambda s, b: (s, 0))

    x_arg = inputs_embeds
    gamma = ln_weight
    beta = ln_bias
    if padded:
        x_arg = jnp.pad(inputs_embeds, ((0, 0), (0, 0), (0, H_pad - H)))
        gamma = jnp.pad(ln_weight, (0, H_pad - H))
        beta = jnp.pad(ln_bias, (0, H_pad - H))
    gamma = gamma.reshape(1, H_pad)
    beta = beta.reshape(1, H_pad)

    cost = pl.CostEstimate(
        flops=10 * B * S * H,
        transcendentals=B * S,  # one rsqrt per row
        bytes_accessed=(2 * B * S * H_pad + S * H_pad) * dtype_bytes + 2 * H_pad * 4,
    )

    out = pl.pallas_call(
        _emb_layernorm_kernel(float(eps), H, H_pad),
        out_shape=jax.ShapeDtypeStruct((B, S, H_pad), dtype),
        grid_spec=pltpu.PrefetchScalarGridSpec(
            num_scalar_prefetch=0,
            # Batch innermost: the position block index depends only on `s`,
            # so it is not re-DMA'd across consecutive batch steps.
            grid=(n_s, B),
            in_specs=[
                # Squeezed batch dim -> kernel sees lane-dense (tS, H_pad).
                pl.BlockSpec((pl.Squeezed(), tS, H_pad), lambda s, b: (b, s, 0)),
                pos_spec,
                pl.BlockSpec((1, H_pad), lambda s, b: (0, 0)),  # LN weight
                pl.BlockSpec((1, H_pad), lambda s, b: (0, 0)),  # LN bias
            ],
            out_specs=pl.BlockSpec((pl.Squeezed(), tS, H_pad),
                                   lambda s, b: (b, s, 0)),
        ),
        compiler_params=pltpu.CompilerParams(
            dimension_semantics=("parallel", "parallel"),
            vmem_limit_bytes=int(vmem_limit)),
        cost_estimate=cost,
    )(x_arg, pos_arg, gamma, beta)

    if padded:
        out = out[..., :H]
    return out


# --------------------------------------------------------------------------
# Pure-JAX reference
# --------------------------------------------------------------------------
def _reference(inputs_embeds, position_table, ln_weight, ln_bias,
               past_key_values_length=0, eps=1e-12):
    B, S, H = inputs_embeds.shape
    pos = jax.lax.dynamic_slice(position_table,
                                (past_key_values_length, 0), (S, H))
    e = inputs_embeds + pos[None]
    mean = jnp.mean(e, axis=-1, keepdims=True)
    var = jnp.mean(jnp.square(e - mean), axis=-1, keepdims=True)
    y = (e - mean) / jnp.sqrt(var + eps)
    return y * ln_weight + ln_bias


# --------------------------------------------------------------------------
# Tests
# --------------------------------------------------------------------------
if __name__ == "__main__":
    EPS = 1e-12
    root_key = jax.random.PRNGKey(0)

    def run_case(B, S, H, MAX_POS, pkv, max_block_bytes=None, seed_off=0):
        ks = jax.random.split(jax.random.fold_in(root_key, seed_off), 4)
        x = jax.random.normal(ks[0], (B, S, H), dtype=jnp.float32)
        tbl = jax.random.normal(ks[1], (MAX_POS, H), dtype=jnp.float32) * 0.02
        g = 1.0 + 0.01 * jax.random.normal(ks[2], (H,), dtype=jnp.float32)
        b = 0.01 * jax.random.normal(ks[3], (H,), dtype=jnp.float32)

        out = pretrained_input_embeddings(x, tbl, g, b,
                                          past_key_values_length=pkv, eps=EPS,
                                          max_block_bytes=max_block_bytes)
        out = jax.block_until_ready(out)
        ref = _reference(x, tbl, g, b, pkv, EPS)
        assert out.shape == (B, S, H)
        assert jnp.allclose(out, ref, atol=1e-5, rtol=1e-5), \
            f"mismatch B={B} S={S} H={H} pkv={pkv}"

    # Small spec-shaped config (B=2, S=8, H=32): exercises H-padding to 128
    # (masked-stats path) and the one-time-slice position path.
    run_case(2, 8, 32, 16, pkv=0, seed_off=0)
    run_case(2, 8, 32, 16, pkv=4, seed_off=1)   # unaligned pkv

    # Lane-dense config (H multiple of 128) with real sequence tiling
    # (max_block_bytes forces tS=8 < S=32), exercising the table-read path
    # (tile-aligned pkv) and the slice fallback (unaligned pkv).
    run_case(2, 32, 128, 64, pkv=8, max_block_bytes=8 * 128 * 4, seed_off=2)
    run_case(2, 32, 128, 64, pkv=4, max_block_bytes=8 * 128 * 4, seed_off=3)

    print("KERNEL_OK")
</pallas_src>

<mosaic_0001>
module attributes {stable_mosaic.version = 11 : i64} {
  func.func @kernel(%arg0: i32, %arg1: i32, %arg2: memref<1x8x128xf32, #tpu.memory_space<vmem>>, %arg3: memref<8x128xf32, #tpu.memory_space<vmem>>, %arg4: memref<1x128xf32, #tpu.memory_space<vmem>>, %arg5: memref<1x128xf32, #tpu.memory_space<vmem>>, %arg6: memref<1x8x128xf32, #tpu.memory_space<vmem>>) attributes {dimension_semantics = [#tpu.dimension_semantics<parallel>, #tpu.dimension_semantics<parallel>], iteration_bounds = array<i64: 1, 2>, scalar_prefetch = 0 : i64, scratch_operands = 0 : i64, tpu.core_type = #tpu.core_type<tc>, window_params = [{transform_indices = @transform_0, window_bounds = array<i64: 1, 8, 128>}, {transform_indices = @transform_1, window_bounds = array<i64: 8, 128>}, {pipeline_mode = #tpu.pipeline_mode<synchronous>, transform_indices = @transform_2, window_bounds = array<i64: 1, 128>}, {pipeline_mode = #tpu.pipeline_mode<synchronous>, transform_indices = @transform_3, window_bounds = array<i64: 1, 128>}, {transform_indices = @transform_4, window_bounds = array<i64: 1, 8, 128>}]} {
    %c0 = arith.constant 0 : index
    %c0_0 = arith.constant 0 : index
    %c0_1 = arith.constant 0 : index
    %0 = vector.load %arg2[%c0, %c0_0, %c0_1] : memref<1x8x128xf32, #tpu.memory_space<vmem>>, vector<1x8x128xf32>
    %1 = vector.shape_cast %0 : vector<1x8x128xf32> to vector<8x128xf32>
    %c0_2 = arith.constant 0 : index
    %c0_3 = arith.constant 0 : index
    %2 = vector.load %arg3[%c0_2, %c0_3] : memref<8x128xf32, #tpu.memory_space<vmem>>, vector<8x128xf32>
    %3 = arith.addf %1, %2 : vector<8x128xf32>
    %cst = arith.constant dense<0.000000e+00> : vector<8xf32>
    %4 = vector.multi_reduction <add>, %3, %cst [1] : vector<8x128xf32> to vector<8xf32>
    %5 = vector.shape_cast %4 : vector<8xf32> to vector<8x1xf32>
    %cst_4 = arith.constant 3.125000e-02 : f32
    %6 = vector.broadcast %cst_4 : f32 to vector<8x1xf32>
    %7 = arith.mulf %5, %6 : vector<8x1xf32>
    %8 = vector.broadcast %7 : vector<8x1xf32> to vector<8x128xf32>
    %9 = arith.subf %3, %8 : vector<8x128xf32>
    %10 = tpu.iota {dimensions = array<i32: 1>} : vector<8x128xi32>
    %c32_i32 = arith.constant 32 : i32
    %11 = vector.broadcast %c32_i32 : i32 to vector<8x128xi32>
    %12 = arith.cmpi slt, %10, %11 : vector<8x128xi32>
    %cst_5 = arith.constant 0.000000e+00 : f32
    %13 = vector.broadcast %cst_5 : f32 to vector<8x128xf32>
    %14 = arith.select %12, %9, %13 : vector<8x128xi1>, vector<8x128xf32>
    %15 = arith.mulf %14, %14 : vector<8x128xf32>
    %cst_6 = arith.constant dense<0.000000e+00> : vector<8xf32>
    %16 = vector.multi_reduction <add>, %15, %cst_6 [1] : vector<8x128xf32> to vector<8xf32>
    %17 = vector.shape_cast %16 : vector<8xf32> to vector<8x1xf32>
    %cst_7 = arith.constant 3.125000e-02 : f32
    %18 = vector.broadcast %cst_7 : f32 to vector<8x1xf32>
    %19 = arith.mulf %17, %18 : vector<8x1xf32>
    %cst_8 = arith.constant 9.99999996E-13 : f32
    %20 = vector.broadcast %cst_8 : f32 to vector<8x1xf32>
    %21 = arith.addf %19, %20 : vector<8x1xf32>
    %22 = math.rsqrt %21 : vector<8x1xf32>
    %23 = vector.broadcast %22 : vector<8x1xf32> to vector<8x128xf32>
    %24 = arith.mulf %14, %23 : vector<8x128xf32>
    %c0_9 = arith.constant 0 : index
    %c0_10 = arith.constant 0 : index
    %25 = vector.load %arg4[%c0_9, %c0_10] : memref<1x128xf32, #tpu.memory_space<vmem>>, vector<1x128xf32>
    %26 = vector.broadcast %25 : vector<1x128xf32> to vector<8x128xf32>
    %27 = arith.mulf %24, %26 : vector<8x128xf32>
    %c0_11 = arith.constant 0 : index
    %c0_12 = arith.constant 0 : index
    %28 = vector.load %arg5[%c0_11, %c0_12] : memref<1x128xf32, #tpu.memory_space<vmem>>, vector<1x128xf32>
    %29 = vector.broadcast %28 : vector<1x128xf32> to vector<8x128xf32>
    %30 = arith.addf %27, %29 : vector<8x128xf32>
    %c0_13 = arith.constant 0 : index
    %c0_14 = arith.constant 0 : index
    %c0_15 = arith.constant 0 : index
    %31 = vector.load %arg6[%c0_13, %c0_14, %c0_15] : memref<1x8x128xf32, #tpu.memory_space<vmem>>, vector<1x8x128xf32>
    %32 = vector.shape_cast %31 : vector<1x8x128xf32> to vector<8x128xf32>
    %33 = vector.shape_cast %30 : vector<8x128xf32> to vector<1x8x128xf32>
    tpu.vector_store %arg6[%c0_13, %c0_14, %c0_15], %33 {strides = array<i32>} : memref<1x8x128xf32, #tpu.memory_space<vmem>>, vector<1x8x128xf32>,
    return
  }
  func.func @transform_0(%arg0: i32, %arg1: i32) -> (i32, i32, i32) {
    %c0_i32 = arith.constant 0 : i32
    %c0_i32_0 = arith.constant 0 : i32
    return %arg1, %arg0, %c0_i32 : i32, i32, i32
  }
  func.func @transform_1(%arg0: i32, %arg1: i32) -> (i32, i32) {
    %c0_i32 = arith.constant 0 : i32
    %c0_i32_0 = arith.constant 0 : i32
    return %arg0, %c0_i32 : i32, i32
  }
  func.func @transform_2(%arg0: i32, %arg1: i32) -> (i32, i32) {
    %c0_i32 = arith.constant 0 : i32
    %c0_i32_0 = arith.constant 0 : i32
    %c0_i32_1 = arith.constant 0 : i32
    return %c0_i32, %c0_i32_0 : i32, i32
  }
  func.func @transform_3(%arg0: i32, %arg1: i32) -> (i32, i32) {
    %c0_i32 = arith.constant 0 : i32
    %c0_i32_0 = arith.constant 0 : i32
    %c0_i32_1 = arith.constant 0 : i32
    return %c0_i32, %c0_i32_0 : i32, i32
  }
  func.func @transform_4(%arg0: i32, %arg1: i32) -> (i32, i32, i32) {
    %c0_i32 = arith.constant 0 : i32
    %c0_i32_0 = arith.constant 0 : i32
    return %arg1, %arg0, %c0_i32 : i32, i32, i32
  }
}

</mosaic_0001>

<llo_original>
// kernel: tpu_custom_call.1
$region0: #{tpu_custom_call.1}
  #allocation0 [shape = 'u32[]', space=smem, size = 0x4, offset = 0x4, fixed_abs, tag = 'smem constant byte address 0x4 - core index']
  #allocation1 [shape = 'u32[144,128]{1,0:T(1,128)}', space=vmem, size = 0x12000, scoped, tag = 'internal scratch']
  %s0 = inlined_call_operand.hbm [shape: f32[2,8,128], index: 0, kind: input, shape index: {}]
  %s1 = inlined_call_operand.hbm [shape: f32[8,128], index: 1, kind: input, shape index: {}]
  %s2 = inlined_call_operand.vmem [shape: f32[1,128], index: 2, kind: input, shape index: {}]
  %s3 = inlined_call_operand.vmem [shape: f32[1,128], index: 3, kind: input, shape index: {}]
  %s4 = inlined_call_operand.hbm [shape: f32[2,8,128], index: 4, kind: output, shape index: {}]
  %s5 = sld [smem:[#allocation0]]
  $region57: #{tpu_custom_call.1} parent=0
    _
  %s7 = ssub.s32 1, %s5
  %s8 = scalar_select 0, %s7, %s5
  $region1: #{tpu_custom_call.1} parent=0
    #allocation2 [shape = 'u8[8192]{0}', space=vmem, size = 0x2000, scoped, tag = 'input window, operand 0']
    #allocation3 [shape = 's32[2]{0}', space=sflag, size = 0x8, scoped, tag = 'scoped memory for tpu_custom_call.1']
    #allocation4 [shape = 's32[2]{0}', space=sflag, size = 0x8, scoped, tag = 'scoped memory for tpu_custom_call.1']
    #allocation5 [shape = 'u8[4096]{0}', space=vmem, size = 0x1000, scoped, tag = 'input window, operand 1, single buffered']
    #allocation6 [shape = 's32[1]{0}', space=sflag, size = 0x4, scoped, tag = 'scoped memory for tpu_custom_call.1']
    #allocation7 [shape = 'u8[8192]{0}', space=vmem, size = 0x2000, scoped, tag = 'output window, operand 0']
    %9 = vsyncpa [#allocation3], 0
    %s10 = scalar_lea.sflag [#allocation3], 1
    %11 = vsyncpa %s10, 0
    %12 = vsyncpa [#allocation6], 0
    %13 = vsyncpa [#allocation4], 0
    %s14 = scalar_lea.sflag [#allocation4], 1
    %15 = vsyncpa %s14, 0
    loop: start=0, step=1, limit=4
    $region2: #{tpu_custom_call.1} parent=1 // loop_pre_header
      _
    $region3: #{tpu_custom_call.1} parent=1 // loop_header
      %s17 = sphi 0, %s21
      %p18 = scmp.ge.s32.totalorder %s17, 4
      %s24 = sphi 0, %s36
      %s25 = sphi 0, %s32
      %s26 = sphi 0, %s24
      %s27 = sphi 0, %s25
      %s28 = sphi 0, %s26
      %s29 = sphi 0, %s27
      %s41 = sphi 0, %s43
      %s44 = sphi 0, %s41
      %s45 = sphi 0, %s44
      %s61 = sphi 0, %s45
      %s67 = sphi 0, %s69
      %s70 = sphi 0, %s67
      %s71 = sphi 0, %s70
      %s87 = sphi 0, %s71
      %s91 = sphi 0, %s91
      %s93 = sphi 0, %s91
      %s94 = sphi 0, %s93
      %s108 = sphi 0, %s94
      %s112 = sphi 0, %s112
      %s114 = sphi 0, %s112
      %s115 = sphi 0, %s114
      %s129 = sphi 0, %s115
      %s137 = sphi 0, %s139
      %s140 = sphi 0, %s137
      %s141 = sphi 0, %s140
      %s157 = sphi 0, %s141
    $region4: #{tpu_custom_call.1} parent=1 // loop_header_branch
      %20 = sbr.rel (%p18) target = $region8
    $region5: #{tpu_custom_call.1} parent=1 // loop_body
      %s22 = ssub.s32 %s17, 1
      %s23 = ssub.s32 %s17, 2
      %s30 = sadd.s32 1, %s25
      %p31 = scmp.ge.s32.totalorder %s30, 2
      %s32 = scalar_select %p31, 0, %s30
      %s33 = sadd.s32 1, %s24
      %s34 = scalar_select %p31, %s33, %s24
      %p35 = scmp.ge.s32.totalorder %s34, 1
      %s36 = scalar_select %p35, 0, %s34
      %s37 = ssub.s32 %s25, %s32
      %s38 = ssub.s32 %s24, %s36
      %s39 = sor.u32 %s37, %s38
      %p40 = scmp.eq.s32.totalorder %s39, 0
      %s42 = sadd.s32 %s41, 1
      %s43 = scalar_select %p40, %s41, %s42
      %p46 = pneg %p40
      %p47 = scmp.eq.s32.totalorder %s17, 1
      %p48 = por %p46, %p47
      %p49 = scmp.ne.s32.totalorder %s41, %s44
      %p50 = scmp.eq.s32.totalorder %s17, 0
      %p51 = por %p49, %p50
      %p52 = scmp.ne.s32.totalorder %s41, %s44
      %p53 = scmp.eq.s32.totalorder %s22, 1
      %p54 = por %p52, %p53
      %p55 = scmp.ne.s32.totalorder %s44, %s45
      %p56 = scmp.eq.s32.totalorder %s22, 0
      %p57 = por %p55, %p56
      %p58 = scmp.ne.s32.totalorder %s44, %s45
      %p59 = scmp.eq.s32.totalorder %s23, 1
      %p60 = por %p58, %p59
      %p62 = scmp.ne.s32.totalorder %s45, %s61
      %p63 = scmp.eq.s32.totalorder %s23, 0
      %p64 = por %p62, %p63
      %s65 = ssub.s32 %s24, %s36
      %p66 = scmp.eq.s32.totalorder %s65, 0
      %s68 = sadd.s32 %s67, 1
      %s69 = scalar_select %p66, %s67, %s68
      %p72 = pneg %p66
      %p73 = scmp.eq.s32.totalorder %s17, 1
      %p74 = por %p72, %p73
      %p75 = scmp.ne.s32.totalorder %s67, %s70
      %p76 = scmp.eq.s32.totalorder %s17, 0
      %p77 = por %p75, %p76
      %p78 = scmp.ne.s32.totalorder %s67, %s70
      %p79 = scmp.eq.s32.totalorder %s22, 1
      %p80 = por %p78, %p79
      %p81 = scmp.ne.s32.totalorder %s70, %s71
      %p82 = scmp.eq.s32.totalorder %s22, 0
      %p83 = por %p81, %p82
      %p84 = scmp.ne.s32.totalorder %s70, %s71
      %p85 = scmp.eq.s32.totalorder %s23, 1
      %p86 = por %p84, %p85
      %p88 = scmp.ne.s32.totalorder %s71, %s87
      %p89 = scmp.eq.s32.totalorder %s23, 0
      %p90 = por %p88, %p89
      %s92 = sadd.s32 %s91, 1
      %p95 = scmp.eq.s32.totalorder %s17, 1
      %p96 = scmp.ne.s32.totalorder %s91, %s93
      %p97 = scmp.eq.s32.totalorder %s17, 0
      %p98 = por %p96, %p97
      %p99 = scmp.ne.s32.totalorder %s91, %s93
      %p100 = scmp.eq.s32.totalorder %s22, 1
      %p101 = por %p99, %p100
      %p102 = scmp.ne.s32.totalorder %s93, %s94
      %p103 = scmp.eq.s32.totalorder %s22, 0
      %p104 = por %p102, %p103
      %p105 = scmp.ne.s32.totalorder %s93, %s94
      %p106 = scmp.eq.s32.totalorder %s23, 1
      %p107 = por %p105, %p106
      %p109 = scmp.ne.s32.totalorder %s94, %s108
      %p110 = scmp.eq.s32.totalorder %s23, 0
      %p111 = por %p109, %p110
      %s113 = sadd.s32 %s112, 1
      %p116 = scmp.eq.s32.totalorder %s17, 1
      %p117 = scmp.ne.s32.totalorder %s112, %s114
      %p118 = scmp.eq.s32.totalorder %s17, 0
      %p119 = por %p117, %p118
      %p120 = scmp.ne.s32.totalorder %s112, %s114
      %p121 = scmp.eq.s32.totalorder %s22, 1
      %p122 = por %p120, %p121
      %p123 = scmp.ne.s32.totalorder %s114, %s115
      %p124 = scmp.eq.s32.totalorder %s22, 0
      %p125 = por %p123, %p124
      %p126 = scmp.ne.s32.totalorder %s114, %s115
      %p127 = scmp.eq.s32.totalorder %s23, 1
      %p128 = por %p126, %p127
      %p130 = scmp.ne.s32.totalorder %s115, %s129
      %p131 = scmp.eq.s32.totalorder %s23, 0
      %p132 = por %p130, %p131
      %s133 = ssub.s32 %s25, %s32
      %s134 = ssub.s32 %s24, %s36
      %s135 = sor.u32 %s133, %s134
      %p136 = scmp.eq.s32.totalorder %s135, 0
      %s138 = sadd.s32 %s137, 1
      %s139 = scalar_select %p136, %s137, %s138
      %p142 = pneg %p136
      %p143 = scmp.eq.s32.totalorder %s17, 1
      %p144 = por %p142, %p143
      %p145 = scmp.ne.s32.totalorder %s137, %s140
      %p146 = scmp.eq.s32.totalorder %s17, 0
      %p147 = por %p145, %p146
      %p148 = scmp.ne.s32.totalorder %s137, %s140
      %p149 = scmp.eq.s32.totalorder %s22, 1
      %p150 = por %p148, %p149
      %p151 = scmp.ne.s32.totalorder %s140, %s141
      %p152 = scmp.eq.s32.totalorder %s22, 0
      %p153 = por %p151, %p152
      %p154 = scmp.ne.s32.totalorder %s140, %s141
      %p155 = scmp.eq.s32.totalorder %s23, 1
      %p156 = por %p154, %p155
      %p158 = scmp.ne.s32.totalorder %s141, %s157
      %p159 = scmp.eq.s32.totalorder %s23, 0
      %p160 = por %p158, %p159
      %p161 = scmp.le.s32.totalorder 1, %s17
      %p162 = scmp.lt.s32.totalorder %s17, 3
      %p163 = pnand %p161, %p162
      %p164 = pneg %p163
      // Predicated region
      $region9: #{tpu_custom_call.1} parent=5 // pred_check
        _
      $region10: #{tpu_custom_call.1} parent=5 // pred_check_branch
        %166 = sbr.rel (%p163) target = $region12
      $region11: #{tpu_custom_call.1} parent=5 // pred_region
        %s167 = ssub.s32 %s17, 1
        // Predicated region
        $region13: #{tpu_custom_call.1} parent=11 // pred_check
          %p168 = pneg %p83
        $region14: #{tpu_custom_call.1} parent=11 // pred_check_branch
          %170 = sbr.rel (%p168) target = $region16
        $region15: #{tpu_custom_call.1} parent=11 // pred_region
          %s172 = ssub.s32 128, 128
          %173 = vsyncadd [#allocation6], %s172
          %s174 = smul.addr %s26, 128
          %s175 = scalar_lea.hbm %s1, %s174
          %s177 = sshll.u32 [#allocation5], 4
          %s178 = int_to_ptr.vmem [resolvable:$true] %s177
          %180 = dma.hbm_to_vmem [thread:$0]  %s175, 128, %s178, [#allocation6]
        $region16: #{tpu_custom_call.1} parent=11 // pred_fallthru
          _
        // Predicated region
        $region17: #{tpu_custom_call.1} parent=11 // pred_check
          %p181 = pneg %p104
        $region18: #{tpu_custom_call.1} parent=11 // pred_check_branch
          %183 = sbr.rel (%p181) target = $region20
        $region19: #{tpu_custom_call.1} parent=11 // pred_region
          _
        $region20: #{tpu_custom_call.1} parent=11 // pred_fallthru
          _
        // Predicated region
        $region21: #{tpu_custom_call.1} parent=11 // pred_check
          %p184 = pneg %p125
        $region22: #{tpu_custom_call.1} parent=11 // pred_check_branch
          %186 = sbr.rel (%p184) target = $region24
        $region23: #{tpu_custom_call.1} parent=11 // pred_region
          _
        $region24: #{tpu_custom_call.1} parent=11 // pred_fallthru
          _
      $region12: #{tpu_custom_call.1} parent=5 // pred_fallthru
        _
      %p187 = scmp.lt.s32.totalorder %s17, 2
      // Predicated region
      $region25: #{tpu_custom_call.1} parent=5 // pred_check
        %p188 = pneg %p187
      $region26: #{tpu_custom_call.1} parent=5 // pred_check_branch
        %190 = sbr.rel (%p188) target = $region28
      $region27: #{tpu_custom_call.1} parent=5 // pred_region
        // Predicated region
        $region29: #{tpu_custom_call.1} parent=27 // pred_check
          %p191 = pneg %p51
        $region30: #{tpu_custom_call.1} parent=27 // pred_check_branch
          %193 = sbr.rel (%p191) target = $region32
        $region31: #{tpu_custom_call.1} parent=27 // pred_region
          %s194 = sand.u32 %s41, 1
          %s195 = scalar_lea.sflag [#allocation3], %s194
          %s196 = sand.u32 %s41, 1
          %s197 = smul.addr %s196, 8
          %s198 = scalar_lea.vmem [#allocation2], %s197
          %s200 = ssub.s32 128, 128
          %201 = vsyncadd %s195, %s200
          %s202 = sadd.s32 %s24, %s25
          %s203 = smul.addr %s202, 128
          %s204 = scalar_lea.hbm %s0, %s203
          %s206 = sshll.u32 %s198, 4
          %s207 = int_to_ptr.vmem [resolvable:$true] %s206
          %209 = dma.hbm_to_vmem [thread:$0]  %s204, 128, %s207, %s195
        $region32: #{tpu_custom_call.1} parent=27 // pred_fallthru
          _
      $region28: #{tpu_custom_call.1} parent=5 // pred_fallthru
        _
      %p210 = scmp.le.s32.totalorder 1, %s17
      %p211 = scmp.lt.s32.totalorder %s17, 3
      %p212 = pnand %p210, %p211
      %p213 = pneg %p212
      // Predicated region
      $region33: #{tpu_custom_call.1} parent=5 // pred_check
        _
      $region34: #{tpu_custom_call.1} parent=5 // pred_check_branch
        %215 = sbr.rel (%p212) target = $region36
      $region35: #{tpu_custom_call.1} parent=5 // pred_region
        %s216 = ssub.s32 %s17, 1
        %s217 = sand.u32 %s44, 1
        %s218 = scalar_lea.sflag [#allocation3], %s217
        %s219 = sand.u32 %s44, 1
        %s220 = smul.addr %s219, 8
        %s221 = scalar_lea.vmem [#allocation2], %s220
        // Predicated region
        $region37: #{tpu_custom_call.1} parent=35 // pred_check
          %p222 = pneg %p57
        $region38: #{tpu_custom_call.1} parent=35 // pred_check_branch
          %224 = sbr.rel (%p222) target = $region40
        $region39: #{tpu_custom_call.1} parent=35 // pred_region
          %225 = dma.done %s218, 128
        $region40: #{tpu_custom_call.1} parent=35 // pred_fallthru
          _
        // Predicated region
        $region41: #{tpu_custom_call.1} parent=35 // pred_check
          %p226 = pneg %p83
        $region42: #{tpu_custom_call.1} parent=35 // pred_check_branch
          %228 = sbr.rel (%p226) target = $region44
        $region43: #{tpu_custom_call.1} parent=35 // pred_region
          %229 = dma.done [#allocation6], 128
        $region44: #{tpu_custom_call.1} parent=35 // pred_fallthru
          _
        %s230 = sand.u32 %s44, 1
        %s231 = scalar_lea.sflag [#allocation3], %s230
        %s232 = sand.u32 %s44, 1
        %s233 = smul.addr %s232, 8
        %s234 = scalar_lea.vmem [#allocation2], %s233
        %p235 = pneg %p57
        %p236 = pneg %p54
        %p237 = pneg %p83
        %p238 = pneg %p80
        %p239 = pneg %p104
        %p240 = pneg %p101
        %p241 = pneg %p125
        %p242 = pneg %p122
        %p243 = pneg %p153
        %p244 = pneg %p150
        %s245 = sand.u32 %s140, 1
        %s246 = scalar_lea.sflag [#allocation4], %s245
        %s247 = sand.u32 %s140, 1
        %s248 = smul.addr %s247, 8
        %s249 = scalar_lea.vmem [#allocation7], %s248
        %v250 = vld [vmem:[%s221] sm:$0xff]
        %v251 = vld [vmem:[#allocation5] sm:$0xff]
        %v252 = vadd.f32 %v250, %v251
        %253 = vadd.xlane.f32.xlu0 %v252
        %v254 = vpop.xlane.xlu0 %253
        %v255 = vmul.f32 %v254, 0.03125
        %v256 = vsub.f32 %v252, %v255
        %v257 = vlaneseq
        %v258 = vand.u32 %v257, 127
        %vm259 = vcmp.lt.s32.totalorder %v258, 32
        %v260 = vsel %vm259, %v256, 0.0
        %v261 = vmul.f32 %v260, %v260
        %262 = vadd.xlane.f32.xlu0 %v261
        %v263 = vpop.xlane.xlu0 %262
        %v264 = vmul.f32 %v263, 0.03125
        %v265 = vadd.f32 %v264, 1e-12
        %v266 = vrsqrt.pop %v265
        %v267 = vmul.f32 %v260, %v266
        %v268 = vld [vmem:[%s2] sm:$0x1]
        %v270 = vlaneseq
        %v271 = vshrl.u32 %v270, 7
        %v272 = vsub.s32 0, %v271
        %v273 = vrot.slane %v268, %v272
        %v275 = vmul.f32 %v267, %v273
        %v276 = vld [vmem:[%s3] sm:$0x1]
        %v278 = vlaneseq
        %v279 = vshrl.u32 %v278, 7
        %v280 = vsub.s32 0, %v279
        %v281 = vrot.slane %v276, %v280
        %v283 = vadd.f32 %v275, %v281
        %284 = vst [vmem:[%s249] sm:$0xff] %v283
        %s285 = sand.u32 %s140, 1
        %s286 = scalar_lea.sflag [#allocation4], %s285
        %s287 = sand.u32 %s140, 1
        %s288 = smul.addr %s287, 8
        %s289 = scalar_lea.vmem [#allocation7], %s288
        // Predicated region
        $region45: #{tpu_custom_call.1} parent=35 // pred_check
          %p290 = pneg %p150
        $region46: #{tpu_custom_call.1} parent=35 // pred_check_branch
          %292 = sbr.rel (%p290) target = $region48
        $region47: #{tpu_custom_call.1} parent=35 // pred_region
          %s294 = ssub.s32 128, 128
          %295 = vsyncadd %s286, %s294
          %s296 = sadd.s32 %s26, %s27
          %s297 = smul.addr %s296, 128
          %s298 = scalar_lea.hbm %s4, %s297
          %s300 = sshll.u32 %s289, 4
          %s301 = int_to_ptr.vmem [resolvable:$true] %s300
          %303 = dma.vmem_to_hbm [thread:$0]  %s301, 128, %s298, %s286
        $region48: #{tpu_custom_call.1} parent=35 // pred_fallthru
          _
      $region36: #{tpu_custom_call.1} parent=5 // pred_fallthru
        _
      %p304 = scmp.le.s32.totalorder 2, %s17
      // Predicated region
      $region49: #{tpu_custom_call.1} parent=5 // pred_check
        %p305 = pneg %p304
      $region50: #{tpu_custom_call.1} parent=5 // pred_check_branch
        %307 = sbr.rel (%p305) target = $region52
      $region51: #{tpu_custom_call.1} parent=5 // pred_region
        %s308 = ssub.s32 %s17, 2
        // Predicated region
        $region53: #{tpu_custom_call.1} parent=51 // pred_check
          %p309 = pneg %p156
        $region54: #{tpu_custom_call.1} parent=51 // pred_check_branch
          %311 = sbr.rel (%p309) target = $region56
        $region55: #{tpu_custom_call.1} parent=51 // pred_region
          %s312 = sand.u32 %s141, 1
          %s313 = scalar_lea.sflag [#allocation4], %s312
          %s314 = sand.u32 %s141, 1
          %s315 = smul.addr %s314, 8
          %s316 = scalar_lea.vmem [#allocation7], %s315
          %317 = dma.done %s313, 128
        $region56: #{tpu_custom_call.1} parent=51 // pred_fallthru
          _
      $region52: #{tpu_custom_call.1} parent=5 // pred_fallthru
        _
    $region6: #{tpu_custom_call.1} parent=1 // loop_footer
      %s21 = sadd.s32 1, %s17
    $region7: #{tpu_custom_call.1} parent=1 // loop_footer_branch
      %16 = sbr.rel target = $region3
    $region8: #{tpu_custom_call.1} parent=1 // loop_exit
      _
    %318 = vsyncpa [#allocation3], 1
    %s319 = scalar_lea.sflag [#allocation3], 1
    %320 = vsyncpa %s319, 1
    %321 = vsyncpa [#allocation6], 1
    %322 = vsyncpa [#allocation4], 1
    %s323 = scalar_lea.sflag [#allocation4], 1
    %324 = vsyncpa %s323, 1

</llo_original>
